<compile_context>
chip_gen: v7x
topology: tpu7x:2x2x1
jax: 0.10.0
libtpu: 0.0.40
codegen_flags: <defaults>
</compile_context>

<pallas_src>
import functools

import jax
import jax.numpy as jnp
from jax.experimental import pallas as pl
from jax.experimental.pallas import tpu as pltpu


def _round_up(x, m):
    return ((x + m - 1) // m) * m


def _pick_tile(dim, preferred):
    """Largest multiple of 128 that divides `dim` (itself a multiple of 128) and is
    <= preferred."""
    if dim <= preferred:
        return dim
    for t in range(preferred - preferred % 128, 127, -128):
        if dim % t == 0:
            return t
    return 128


def _vmem_limit_bytes(tm, tn, tkh, Ep, x_itemsize, out_itemsize):
    # Double-buffered input/output tiles + resident f32 accumulator, with 2x headroom.
    x_tile = tm * Ep * x_itemsize
    w13_tile = 2 * Ep * tkh * 2          # w1.T and w3.T tiles, bf16
    w2_tile = tkh * tn * 2               # w2.T tile, bf16
    o_tile = tm * tn * out_itemsize
    acc = tm * tn * 4
    est = 2 * (x_tile + w13_tile + w2_tile + o_tile) + acc
    return int(min(48 * 1024 * 1024, max(2 * est, 8 * 1024 * 1024)))


def _ffn_kernel(*refs, dropout_rate: float, training: bool):
    if training and dropout_rate > 0.0:
        seed_ref, x_ref, w1t_ref, w3t_ref, w2t_ref, o_ref, acc_ref = refs
    else:
        x_ref, w1t_ref, w3t_ref, w2t_ref, o_ref, acc_ref = refs
        seed_ref = None

    k = pl.program_id(2)

    @pl.when(k == 0)
    def _():
        acc_ref[...] = jnp.zeros_like(acc_ref)

    # bf16 MXU operands, f32 accumulation (weights are already bf16 in HBM).
    x = x_ref[...].astype(jnp.bfloat16)
    h1 = jnp.dot(x, w1t_ref[...], preferred_element_type=jnp.float32)
    h3 = jnp.dot(x, w3t_ref[...], preferred_element_type=jnp.float32)
    # silu(h1) * h3 in f32: mul on the VPU, sigmoid's exp/recip on the EUP slot.
    h = (h1 * jax.nn.sigmoid(h1) * h3).astype(jnp.bfloat16)
    # Fused second GEMM: accumulate this hidden tile's contribution to the out tile.
    acc_ref[...] += jnp.dot(h, w2t_ref[...], preferred_element_type=jnp.float32)

    @pl.when(k == pl.num_programs(2) - 1)
    def _():
        out = acc_ref[...]
        if training and dropout_rate > 0.0:
            # Unique PRNG stream per output tile so dropout masks are uncorrelated.
            block = pl.program_id(0) * pl.num_programs(1) + pl.program_id(1)
            pltpu.prng_seed(seed_ref[0] + block)
            bits = pltpu.bitcast(pltpu.prng_random_bits(out.shape), jnp.uint32)
            u = (bits >> jnp.uint32(9)).astype(jnp.float32) * (1.0 / (1 << 23))
            keep = (u >= jnp.float32(dropout_rate)).astype(jnp.float32)
            out = out * keep * jnp.float32(1.0 / (1.0 - dropout_rate))
        o_ref[...] = out.astype(o_ref.dtype)


def prepare_weights(w1, w2, w3, *, compute_dtype=jnp.bfloat16):
    """One-time host-side prep (do NOT redo per forward call): transpose to (in, out),
    zero-pad to a multiple of 128, cast to the MXU compute dtype."""
    E = w1.shape[0]
    Ep = _round_up(E, 128)

    def prep(w):
        wt = jnp.asarray(w).T                          # (in, out)
        wt = jnp.pad(wt, ((0, Ep - E), (0, Ep - E)))   # lane-dense padding
        return wt.astype(compute_dtype)

    return {"w1t": prep(w1), "w2t": prep(w2), "w3t": prep(w3)}


def feed_forward(x, params, *, dropout_rate=0.2, training=False, seed=0):
    """Pallas implementation of FeedForward.forward.

    x:      (..., E) activations.
    params: output of prepare_weights (pre-transposed, 128-padded, bf16 weights).
    """
    orig_shape = x.shape
    E = orig_shape[-1]
    w1t, w2t, w3t = params["w1t"], params["w2t"], params["w3t"]
    Ep = w1t.shape[0]
    assert Ep == _round_up(E, 128)
    assert w1t.shape == w2t.shape == w3t.shape == (Ep, Ep)

    xf = x.reshape(-1, E)
    N = xf.shape[0]

    # Tile plan: lane-dense out/hidden tiles (multiples of 128), sublane-aligned row tile.
    tm = min(256, _round_up(N, 8))
    Np = _round_up(N, tm)
    tn = _pick_tile(Ep, 1024)    # output-column tile
    tkh = _pick_tile(Ep, 512)    # hidden tile (contraction of the second GEMM)

    xf = jnp.pad(xf, ((0, Np - N), (0, Ep - E)))

    grid = (Np // tm, Ep // tn, Ep // tkh)

    kernel = functools.partial(_ffn_kernel,
                               dropout_rate=float(dropout_rate),
                               training=bool(training))

    in_specs = [
        pl.BlockSpec((tm, Ep), lambda i, j, k, *_: (i, 0)),    # x row tile (DMA'd once per i)
        pl.BlockSpec((Ep, tkh), lambda i, j, k, *_: (0, k)),   # w1.T hidden-column tile
        pl.BlockSpec((Ep, tkh), lambda i, j, k, *_: (0, k)),   # w3.T hidden-column tile
        pl.BlockSpec((tkh, tn), lambda i, j, k, *_: (k, j)),   # w2.T tile
    ]
    out_spec = pl.BlockSpec((tm, tn), lambda i, j, k, *_: (i, j))

    args = (xf, w1t, w3t, w2t)
    num_prefetch = 0
    if training and dropout_rate > 0.0:
        args = (jnp.asarray([seed], dtype=jnp.int32),) + args
        num_prefetch = 1

    out = pl.pallas_call(
        kernel,
        out_shape=jax.ShapeDtypeStruct((Np, Ep), x.dtype),
        grid_spec=pltpu.PrefetchScalarGridSpec(
            num_scalar_prefetch=num_prefetch,
            grid=grid,
            in_specs=in_specs,
            out_specs=out_spec,
            scratch_shapes=[pltpu.VMEM((tm, tn), jnp.float32)],
        ),
        compiler_params=pltpu.CompilerParams(
            dimension_semantics=("parallel", "parallel", "arbitrary"),
            vmem_limit_bytes=_vmem_limit_bytes(
                tm, tn, tkh, Ep, xf.dtype.itemsize, jnp.dtype(x.dtype).itemsize)),
    )(*args)

    return out[:N, :E].reshape(orig_shape)


def _reference(x, w1, w2, w3):
    # Pure-JAX f32 reference of the PyTorch forward (dropout in eval mode = identity).
    return (jax.nn.silu(x @ w1.T) * (x @ w3.T)) @ w2.T


if __name__ == "__main__":
    B, T, E = 2, 8, 32  # batch=2, seq=8, embedding_size=32

    key = jax.random.PRNGKey(0)
    kx, k1, k2, k3 = jax.random.split(key, 4)

    # torch nn.Linear default init: U(-1/sqrt(in), 1/sqrt(in)), weight shape (out, in)
    bound = 1.0 / (E ** 0.5)
    x = jax.random.normal(kx, (B, T, E), dtype=jnp.float32)
    w1 = jax.random.uniform(k1, (E, E), jnp.float32, -bound, bound)
    w2 = jax.random.uniform(k2, (E, E), jnp.float32, -bound, bound)
    w3 = jax.random.uniform(k3, (E, E), jnp.float32, -bound, bound)

    # One-time weight prep (transpose + pad + bf16) hoisted out of the per-call path.
    params = prepare_weights(w1, w2, w3)

    out = feed_forward(x, params, dropout_rate=0.2, training=False)
    out = jax.block_until_ready(out)

    ref = _reference(x, w1, w2, w3)
    assert out.shape == (B, T, E)
    # bf16 MXU operands with f32 accumulation -> slightly looser tolerance than pure f32.
    assert jnp.all(jnp.isfinite(out)), "non-finite output"
    assert jnp.allclose(out, ref, atol=2e-2, rtol=2e-2), "mismatch vs reference"

    print("KERNEL_OK")
</pallas_src>

<mosaic_0001>
module attributes {stable_mosaic.version = 11 : i64} {
  func.func @_ffn_kernel(%arg0: i32, %arg1: i32, %arg2: i32, %arg3: memref<16x128xf32, #tpu.memory_space<vmem>>, %arg4: memref<128x128xbf16, #tpu.memory_space<vmem>>, %arg5: memref<128x128xbf16, #tpu.memory_space<vmem>>, %arg6: memref<128x128xbf16, #tpu.memory_space<vmem>>, %arg7: memref<16x128xf32, #tpu.memory_space<vmem>>, %arg8: memref<16x128xf32, #tpu.memory_space<vmem>>) attributes {dimension_semantics = [#tpu.dimension_semantics<parallel>, #tpu.dimension_semantics<parallel>, #tpu.dimension_semantics<arbitrary>], iteration_bounds = array<i64: 1, 1, 1>, scalar_prefetch = 0 : i64, scratch_operands = 1 : i64, tpu.core_type = #tpu.core_type<tc>, window_params = [{transform_indices = @transform_0, window_bounds = array<i64: 16, 128>}, {transform_indices = @transform_1, window_bounds = array<i64: 128, 128>}, {transform_indices = @transform_2, window_bounds = array<i64: 128, 128>}, {transform_indices = @transform_3, window_bounds = array<i64: 128, 128>}, {transform_indices = @transform_4, window_bounds = array<i64: 16, 128>}]} {
    %c0_i32 = arith.constant 0 : i32
    %0 = arith.cmpi eq, %arg2, %c0_i32 : i32
    %1 = arith.extui %0 : i1 to i32
    %c0_i32_0 = arith.constant 0 : i32
    %2 = arith.cmpi ne, %1, %c0_i32_0 : i32
    scf.if %2 {
      %cst_17 = arith.constant 0.000000e+00 : f32
      %25 = vector.broadcast %cst_17 : f32 to vector<16x128xf32>
      %c0_18 = arith.constant 0 : index
      %c0_19 = arith.constant 0 : index
      %26 = vector.load %arg8[%c0_18, %c0_19] : memref<16x128xf32, #tpu.memory_space<vmem>>, vector<16x128xf32>
      tpu.vector_store %arg8[%c0_18, %c0_19], %25 {strides = array<i32>} : memref<16x128xf32, #tpu.memory_space<vmem>>, vector<16x128xf32>,
    } else {
    }
    %c0 = arith.constant 0 : index
    %c0_1 = arith.constant 0 : index
    %3 = vector.load %arg3[%c0, %c0_1] : memref<16x128xf32, #tpu.memory_space<vmem>>, vector<16x128xf32>
    %4 = arith.truncf %3 : vector<16x128xf32> to vector<16x128xbf16>
    %c0_2 = arith.constant 0 : index
    %c0_3 = arith.constant 0 : index
    %5 = vector.load %arg4[%c0_2, %c0_3] : memref<128x128xbf16, #tpu.memory_space<vmem>>, vector<128x128xbf16>
    %cst = arith.constant dense<0.000000e+00> : vector<16x128xf32>
    %6 = tpu.matmul %4, %5, %cst {dimension_numbers = #tpu.dot_dimension_numbers<[1], [0], [0], [1], [0, 0, 1, 1], [], []>} : vector<16x128xbf16>, vector<128x128xbf16>, vector<16x128xf32> -> vector<16x128xf32>
    %c0_4 = arith.constant 0 : index
    %c0_5 = arith.constant 0 : index
    %7 = vector.load %arg5[%c0_4, %c0_5] : memref<128x128xbf16, #tpu.memory_space<vmem>>, vector<128x128xbf16>
    %cst_6 = arith.constant dense<0.000000e+00> : vector<16x128xf32>
    %8 = tpu.matmul %4, %7, %cst_6 {dimension_numbers = #tpu.dot_dimension_numbers<[1], [0], [0], [1], [0, 0, 1, 1], [], []>} : vector<16x128xbf16>, vector<128x128xbf16>, vector<16x128xf32> -> vector<16x128xf32>
    %9 = arith.negf %6 : vector<16x128xf32>
    %10 = math.exp %9 : vector<16x128xf32>
    %cst_7 = arith.constant 1.000000e+00 : f32
    %11 = vector.broadcast %cst_7 : f32 to vector<16x128xf32>
    %12 = arith.addf %11, %10 : vector<16x128xf32>
    %13 = arith.divf %11, %12 : vector<16x128xf32>
    %14 = arith.mulf %6, %13 : vector<16x128xf32>
    %15 = arith.mulf %14, %8 : vector<16x128xf32>
    %16 = arith.truncf %15 : vector<16x128xf32> to vector<16x128xbf16>
    %c0_8 = arith.constant 0 : index
    %c0_9 = arith.constant 0 : index
    %17 = vector.load %arg8[%c0_8, %c0_9] : memref<16x128xf32, #tpu.memory_space<vmem>>, vector<16x128xf32>
    %c0_10 = arith.constant 0 : index
    %c0_11 = arith.constant 0 : index
    %18 = vector.load %arg6[%c0_10, %c0_11] : memref<128x128xbf16, #tpu.memory_space<vmem>>, vector<128x128xbf16>
    %cst_12 = arith.constant dense<0.000000e+00> : vector<16x128xf32>
    %19 = tpu.matmul %16, %18, %cst_12 {dimension_numbers = #tpu.dot_dimension_numbers<[1], [0], [0], [1], [0, 0, 1, 1], [], []>} : vector<16x128xbf16>, vector<128x128xbf16>, vector<16x128xf32> -> vector<16x128xf32>
    %20 = arith.addf %17, %19 : vector<16x128xf32>
    %c0_13 = arith.constant 0 : index
    %c0_14 = arith.constant 0 : index
    %21 = vector.load %arg8[%c0_13, %c0_14] : memref<16x128xf32, #tpu.memory_space<vmem>>, vector<16x128xf32>
    tpu.vector_store %arg8[%c0_13, %c0_14], %20 {strides = array<i32>} : memref<16x128xf32, #tpu.memory_space<vmem>>, vector<16x128xf32>,
    %c0_i32_15 = arith.constant 0 : i32
    %22 = arith.cmpi eq, %arg2, %c0_i32_15 : i32
    %23 = arith.extui %22 : i1 to i32
    %c0_i32_16 = arith.constant 0 : i32
    %24 = arith.cmpi ne, %23, %c0_i32_16 : i32
    scf.if %24 {
      %c0_17 = arith.constant 0 : index
      %c0_18 = arith.constant 0 : index
      %25 = vector.load %arg8[%c0_17, %c0_18] : memref<16x128xf32, #tpu.memory_space<vmem>>, vector<16x128xf32>
      %c0_19 = arith.constant 0 : index
      %c0_20 = arith.constant 0 : index
      %26 = vector.load %arg7[%c0_19, %c0_20] : memref<16x128xf32, #tpu.memory_space<vmem>>, vector<16x128xf32>
      tpu.vector_store %arg7[%c0_19, %c0_20], %25 {strides = array<i32>} : memref<16x128xf32, #tpu.memory_space<vmem>>, vector<16x128xf32>,
    } else {
    }
    return
  }
  func.func @transform_0(%arg0: i32, %arg1: i32, %arg2: i32) -> (i32, i32) {
    %c0_i32 = arith.constant 0 : i32
    %c0_i32_0 = arith.constant 0 : i32
    return %arg0, %c0_i32 : i32, i32
  }
  func.func @transform_1(%arg0: i32, %arg1: i32, %arg2: i32) -> (i32, i32) {
    %c0_i32 = arith.constant 0 : i32
    %c0_i32_0 = arith.constant 0 : i32
    return %c0_i32, %arg2 : i32, i32
  }
  func.func @transform_2(%arg0: i32, %arg1: i32, %arg2: i32) -> (i32, i32) {
    %c0_i32 = arith.constant 0 : i32
    %c0_i32_0 = arith.constant 0 : i32
    return %c0_i32, %arg2 : i32, i32
  }
  func.func @transform_3(%arg0: i32, %arg1: i32, %arg2: i32) -> (i32, i32) {
    %c0_i32 = arith.constant 0 : i32
    return %arg2, %arg1 : i32, i32
  }
  func.func @transform_4(%arg0: i32, %arg1: i32, %arg2: i32) -> (i32, i32) {
    %c0_i32 = arith.constant 0 : i32
    return %arg0, %arg1 : i32, i32
  }
}

</mosaic_0001>

<llo_original>
// kernel: tpu_custom_call.1
$region0: #{tpu_custom_call.1}
  #allocation0 [shape = 'u32[]', space=smem, size = 0x4, offset = 0x4, fixed_abs, tag = 'smem constant byte address 0x4 - core index']
  #allocation1 [shape = 'u32[144,128]{1,0:T(1,128)}', space=vmem, size = 0x12000, scoped, tag = 'internal scratch']
  #allocation2 [shape = 'f32[16,128]{1,0:T(8,128)}', space=vmem, size = 0x2000, scoped, tag = 'scratch operand']
  %s0 = inlined_call_operand.hbm [shape: f32[16,128], index: 0, kind: input, shape index: {}]
  %s1 = inlined_call_operand.hbm [shape: bf16[128,128], index: 1, kind: input, shape index: {}]
  %s2 = inlined_call_operand.hbm [shape: bf16[128,128], index: 2, kind: input, shape index: {}]
  %s3 = inlined_call_operand.hbm [shape: bf16[128,128], index: 3, kind: input, shape index: {}]
  %s4 = inlined_call_operand.hbm [shape: f32[16,128], index: 4, kind: output, shape index: {}]
  %s5 = sld [smem:[#allocation0]]
  $region50: #{tpu_custom_call.1} parent=0
    _
  %s7 = ssub.s32 1, %s5
  %s8 = scalar_select 0, %s7, %s5
  $region1: #{tpu_custom_call.1} parent=0
    #allocation3 [shape = 'u8[8192]{0}', space=vmem, size = 0x2000, scoped, tag = 'input window, operand 0, single buffered']
    #allocation4 [shape = 's32[1]{0}', space=sflag, size = 0x4, scoped, tag = 'scoped memory for tpu_custom_call.1']
    #allocation5 [shape = 's32[1]{0}', space=sflag, size = 0x4, scoped, tag = 'scoped memory for tpu_custom_call.1']
    #allocation6 [shape = 'u8[32768]{0}', space=vmem, size = 0x8000, scoped, tag = 'input window, operand 1, single buffered']
    #allocation7 [shape = 's32[1]{0}', space=sflag, size = 0x4, scoped, tag = 'scoped memory for tpu_custom_call.1']
    #allocation8 [shape = 'u8[32768]{0}', space=vmem, size = 0x8000, scoped, tag = 'input window, operand 2, single buffered']
    #allocation9 [shape = 'u8[32768]{0}', space=vmem, size = 0x8000, scoped, tag = 'input window, operand 3, single buffered']
    #allocation10 [shape = 's32[1]{0}', space=sflag, size = 0x4, scoped, tag = 'scoped memory for tpu_custom_call.1']
    #allocation11 [shape = 'u8[8192]{0}', space=vmem, size = 0x2000, scoped, tag = 'output window, operand 0, single buffered']
    %9 = vsyncpa [#allocation4], 0
    %10 = vsyncpa [#allocation7], 0
    %11 = vsyncpa [#allocation10], 0
    %12 = vsyncpa [#allocation5], 0
    // Predicated region
    $region2: #{tpu_custom_call.1} parent=1 // pred_check
      _
    $region3: #{tpu_custom_call.1} parent=1 // pred_check_branch
      %14 = sbr.rel (0) target = $region5
    $region4: #{tpu_custom_call.1} parent=1 // pred_region
      %s16 = ssub.s32 256, 256
      %17 = vsyncadd [#allocation4], %s16
      %s18 = sshll.u32 [#allocation3], 4
      %s19 = int_to_ptr.vmem [resolvable:$true] %s18
      %24 = dma.hbm_to_vmem [thread:$0]  %s0, 256, %s19, [#allocation4], 128, 128, 8
    $region5: #{tpu_custom_call.1} parent=1 // pred_fallthru
      _
    // Predicated region
    $region6: #{tpu_custom_call.1} parent=1 // pred_check
      _
    $region7: #{tpu_custom_call.1} parent=1 // pred_check_branch
      %26 = sbr.rel (0) target = $region9
    $region8: #{tpu_custom_call.1} parent=1 // pred_region
      %s28 = ssub.s32 1024, 1024
      %29 = vsyncadd [#allocation7], %s28
      %s30 = sshll.u32 [#allocation6], 4
      %s31 = int_to_ptr.vmem [resolvable:$true] %s30
      %36 = dma.hbm_to_vmem [thread:$0]  %s1, 1024, %s31, [#allocation7], 64, 64, 4
    $region9: #{tpu_custom_call.1} parent=1 // pred_fallthru
      _
    // Predicated region
    $region10: #{tpu_custom_call.1} parent=1 // pred_check
      _
    $region11: #{tpu_custom_call.1} parent=1 // pred_check_branch
      %38 = sbr.rel (0) target = $region13
    $region12: #{tpu_custom_call.1} parent=1 // pred_region
      %s40 = ssub.s32 1024, 1024
      %41 = vsyncadd [#allocation7], %s40
      %s42 = sshll.u32 [#allocation8], 4
      %s43 = int_to_ptr.vmem [resolvable:$true] %s42
      %48 = dma.hbm_to_vmem [thread:$0]  %s2, 1024, %s43, [#allocation7], 64, 64, 4
    $region13: #{tpu_custom_call.1} parent=1 // pred_fallthru
      _
    // Predicated region
    $region14: #{tpu_custom_call.1} parent=1 // pred_check
      _
    $region15: #{tpu_custom_call.1} parent=1 // pred_check_branch
      %50 = sbr.rel (0) target = $region17
    $region16: #{tpu_custom_call.1} parent=1 // pred_region
      %s52 = ssub.s32 1024, 1024
      %53 = vsyncadd [#allocation10], %s52
      %s54 = sshll.u32 [#allocation9], 4
      %s55 = int_to_ptr.vmem [resolvable:$true] %s54
      %60 = dma.hbm_to_vmem [thread:$0]  %s3, 1024, %s55, [#allocation10], 64, 64, 4
    $region17: #{tpu_custom_call.1} parent=1 // pred_fallthru
      _
    // Predicated region
    $region18: #{tpu_custom_call.1} parent=1 // pred_check
      _
    $region19: #{tpu_custom_call.1} parent=1 // pred_check_branch
      %62 = sbr.rel (0) target = $region21
    $region20: #{tpu_custom_call.1} parent=1 // pred_region
      %63 = dma.done [#allocation4], 256
    $region21: #{tpu_custom_call.1} parent=1 // pred_fallthru
      _
    // Predicated region
    $region22: #{tpu_custom_call.1} parent=1 // pred_check
      _
    $region23: #{tpu_custom_call.1} parent=1 // pred_check_branch
      %65 = sbr.rel (0) target = $region25
    $region24: #{tpu_custom_call.1} parent=1 // pred_region
      %66 = dma.done [#allocation7], 1024
    $region25: #{tpu_custom_call.1} parent=1 // pred_fallthru
      _
    // Predicated region
    $region26: #{tpu_custom_call.1} parent=1 // pred_check
      _
    $region27: #{tpu_custom_call.1} parent=1 // pred_check_branch
      %68 = sbr.rel (0) target = $region29
    $region28: #{tpu_custom_call.1} parent=1 // pred_region
      %69 = dma.done [#allocation7], 1024
    $region29: #{tpu_custom_call.1} parent=1 // pred_fallthru
      _
    // Predicated region
    $region30: #{tpu_custom_call.1} parent=1 // pred_check
      _
    $region31: #{tpu_custom_call.1} parent=1 // pred_check_branch
      %71 = sbr.rel (0) target = $region33
    $region32: #{tpu_custom_call.1} parent=1 // pred_region
      %72 = dma.done [#allocation10], 1024
    $region33: #{tpu_custom_call.1} parent=1 // pred_fallthru
      _
    %p74 = scmp.eq.s32.totalorder 0, 0
    // Predicated region
    $region34: #{tpu_custom_call.1} parent=1 // pred_check
      %p75 = pneg %p74
    $region35: #{tpu_custom_call.1} parent=1 // pred_check_branch
      %77 = sbr.rel (%p75) target = $region37
    $region36: #{tpu_custom_call.1} parent=1 // pred_region
      %78 = vst [vmem:[#allocation2] sm:$0xff] 0.0
      %79 = vst [vmem:[#allocation2 + $0x8] sm:$0xff] 0.0
    $region37: #{tpu_custom_call.1} parent=1 // pred_fallthru
      _
    %v80 = vld [vmem:[#allocation3] sm:$0xff]
    %v81 = vld [vmem:[#allocation3 + $0x8] sm:$0xff]
    %v82 = vpack.c.bf16 %v81, %v80
    %v83 = vld [vmem:[#allocation6] sm:$0xf]
    %v84 = vld [vmem:[#allocation6 + $0x4] sm:$0xf]
    %v85 = vld [vmem:[#allocation6 + $0x8] sm:$0xf]
    %v86 = vld [vmem:[#allocation6 + $0xc] sm:$0xf]
    %v87 = vld [vmem:[#allocation6 + $0x10] sm:$0xf]
    %v88 = vld [vmem:[#allocation6 + $0x14] sm:$0xf]
    %v89 = vld [vmem:[#allocation6 + $0x18] sm:$0xf]
    %v90 = vld [vmem:[#allocation6 + $0x1c] sm:$0xf]
    %v91 = vld [vmem:[#allocation6 + $0x20] sm:$0xf]
    %v92 = vld [vmem:[#allocation6 + $0x24] sm:$0xf]
    %v93 = vld [vmem:[#allocation6 + $0x28] sm:$0xf]
    %v94 = vld [vmem:[#allocation6 + $0x2c] sm:$0xf]
    %v95 = vld [vmem:[#allocation6 + $0x30] sm:$0xf]
    %v96 = vld [vmem:[#allocation6 + $0x34] sm:$0xf]
    %v97 = vld [vmem:[#allocation6 + $0x38] sm:$0xf]
    %v98 = vld [vmem:[#allocation6 + $0x3c] sm:$0xf]
    %v115 = vunpack.c.l.b16 %v83
    %v116 = vunpack.c.l.b16 %v84
    %v117 = vunpack.c.l.b16 %v85
    %v118 = vunpack.c.l.b16 %v86
    %v119 = vunpack.c.l.b16 %v87
    %v120 = vunpack.c.l.b16 %v88
    %v121 = vunpack.c.l.b16 %v89
    %v122 = vunpack.c.l.b16 %v90
    %v123 = vunpack.c.l.b16 %v91
    %v124 = vunpack.c.l.b16 %v92
    %v125 = vunpack.c.l.b16 %v93
    %v126 = vunpack.c.l.b16 %v94
    %v127 = vunpack.c.l.b16 %v95
    %v128 = vunpack.c.l.b16 %v96
    %v129 = vunpack.c.l.b16 %v97
    %v130 = vunpack.c.l.b16 %v98
    %v131 = vpack.c.b16 %v116, %v115
    %v132 = vpack.c.b16 %v118, %v117
    %v133 = vpack.c.b16 %v120, %v119
    %v134 = vpack.c.b16 %v122, %v121
    %v135 = vpack.c.b16 %v124, %v123
    %v136 = vpack.c.b16 %v126, %v125
    %v137 = vpack.c.b16 %v128, %v127
    %v138 = vpack.c.b16 %v130, %v129
    %147 = vmatprep.subr.bf16.mxu0 0
    %148 = vmatpush1.bf16.msra.mxu0 %v131
    %149 = vmatprep.subr.bf16.mxu0 0
    %150 = vmatpush1.bf16.msra.mxu0 %v132
    %151 = vmatprep.subr.bf16.mxu0 0
    %152 = vmatpush1.bf16.msra.mxu0 %v133
    %153 = vmatprep.subr.bf16.mxu0 0
    %154 = vmatpush1.bf16.msra.mxu0 %v134
    %155 = vmatprep.subr.bf16.mxu0 0
    %156 = vmatpush1.bf16.msra.mxu0 %v135
    %157 = vmatprep.subr.bf16.mxu0 0
    %158 = vmatpush1.bf16.msra.mxu0 %v136
    %159 = vmatprep.subr.bf16.mxu0 0
    %160 = vmatpush1.bf16.msra.mxu0 %v137
    %161 = vmatprep.subr.bf16.mxu0 0
    %162 = vmatpush1.bf16.msra.mxu0 %v138
    %163 = vmatprep.subr.bf16.mxu0 0
    %164 = vmatpush1.bf16.msra.mxu0 0
    %165 = vmatprep.subr.bf16.mxu0 0
    %166 = vmatpush1.bf16.msra.mxu0 0
    %167 = vmatprep.subr.bf16.mxu0 0
    %168 = vmatpush1.bf16.msra.mxu0 0
    %169 = vmatprep.subr.bf16.mxu0 0
    %170 = vmatpush1.bf16.msra.mxu0 0
    %171 = vmatprep.subr.bf16.mxu0 0
    %172 = vmatpush1.bf16.msra.mxu0 0
    %173 = vmatprep.subr.bf16.mxu0 0
    %174 = vmatpush1.bf16.msra.mxu0 0
    %175 = vmatprep.subr.bf16.mxu0 0
    %176 = vmatpush1.bf16.msra.mxu0 0
    %177 = vmatprep.subr.bf16.mxu0 0
    %178 = vmatpush1.bf16.msra.mxu0 0
    %179 = vmatprep.mubr.bf16.mxu0 0
    %180 = vmatmul.mubr.bf16.gmra.mrb[0].mxu0 %v82
    %v181 = vpop.f32.mrb[0].mxu0
    %v182 = vadd.f32 0.0, %v181
    %v183 = vpop.f32.mrb[0].mxu0
    %v184 = vpop.f32.mrb[0].mxu0
    %v185 = vadd.f32 0.0, %v184
    %v186 = vpop.f32.mrb[0].mxu0
    %187 = vdwg.mxu0
    %v188 = vld [vmem:[#allocation8] sm:$0xf]
    %v189 = vld [vmem:[#allocation8 + $0x4] sm:$0xf]
    %v190 = vld [vmem:[#allocation8 + $0x8] sm:$0xf]
    %v191 = vld [vmem:[#allocation8 + $0xc] sm:$0xf]
    %v192 = vld [vmem:[#allocation8 + $0x10] sm:$0xf]
    %v193 = vld [vmem:[#allocation8 + $0x14] sm:$0xf]
    %v194 = vld [vmem:[#allocation8 + $0x18] sm:$0xf]
    %v195 = vld [vmem:[#allocation8 + $0x1c] sm:$0xf]
    %v196 = vld [vmem:[#allocation8 + $0x20] sm:$0xf]
    %v197 = vld [vmem:[#allocation8 + $0x24] sm:$0xf]
    %v198 = vld [vmem:[#allocation8 + $0x28] sm:$0xf]
    %v199 = vld [vmem:[#allocation8 + $0x2c] sm:$0xf]
    %v200 = vld [vmem:[#allocation8 + $0x30] sm:$0xf]
    %v201 = vld [vmem:[#allocation8 + $0x34] sm:$0xf]
    %v202 = vld [vmem:[#allocation8 + $0x38] sm:$0xf]
    %v203 = vld [vmem:[#allocation8 + $0x3c] sm:$0xf]
    %v220 = vunpack.c.l.b16 %v188
    %v221 = vunpack.c.l.b16 %v189
    %v222 = vunpack.c.l.b16 %v190
    %v223 = vunpack.c.l.b16 %v191
    %v224 = vunpack.c.l.b16 %v192
    %v225 = vunpack.c.l.b16 %v193
    %v226 = vunpack.c.l.b16 %v194
    %v227 = vunpack.c.l.b16 %v195
    %v228 = vunpack.c.l.b16 %v196
    %v229 = vunpack.c.l.b16 %v197
    %v230 = vunpack.c.l.b16 %v198
    %v231 = vunpack.c.l.b16 %v199
    %v232 = vunpack.c.l.b16 %v200
    %v233 = vunpack.c.l.b16 %v201
    %v234 = vunpack.c.l.b16 %v202
    %v235 = vunpack.c.l.b16 %v203
    %v236 = vpack.c.b16 %v221, %v220
    %v237 = vpack.c.b16 %v223, %v222
    %v238 = vpack.c.b16 %v225, %v224
    %v239 = vpack.c.b16 %v227, %v226
    %v240 = vpack.c.b16 %v229, %v228
    %v241 = vpack.c.b16 %v231, %v230
    %v242 = vpack.c.b16 %v233, %v232
    %v243 = vpack.c.b16 %v235, %v234
    %252 = vmatprep.subr.bf16.mxu0 0
    %253 = vmatpush1.bf16.msra.mxu0 %v236
    %254 = vmatprep.subr.bf16.mxu0 0
    %255 = vmatpush1.bf16.msra.mxu0 %v237
    %256 = vmatprep.subr.bf16.mxu0 0
    %257 = vmatpush1.bf16.msra.mxu0 %v238
    %258 = vmatprep.subr.bf16.mxu0 0
    %259 = vmatpush1.bf16.msra.mxu0 %v239
    %260 = vmatprep.subr.bf16.mxu0 0
    %261 = vmatpush1.bf16.msra.mxu0 %v240
    %262 = vmatprep.subr.bf16.mxu0 0
    %263 = vmatpush1.bf16.msra.mxu0 %v241
    %264 = vmatprep.subr.bf16.mxu0 0
    %265 = vmatpush1.bf16.msra.mxu0 %v242
    %266 = vmatprep.subr.bf16.mxu0 0
    %267 = vmatpush1.bf16.msra.mxu0 %v243
    %268 = vmatprep.subr.bf16.mxu0 0
    %269 = vmatpush1.bf16.msra.mxu0 0
    %270 = vmatprep.subr.bf16.mxu0 0
    %271 = vmatpush1.bf16.msra.mxu0 0
    %272 = vmatprep.subr.bf16.mxu0 0
    %273 = vmatpush1.bf16.msra.mxu0 0
    %274 = vmatprep.subr.bf16.mxu0 0
    %275 = vmatpush1.bf16.msra.mxu0 0
    %276 = vmatprep.subr.bf16.mxu0 0
    %277 = vmatpush1.bf16.msra.mxu0 0
    %278 = vmatprep.subr.bf16.mxu0 0
    %279 = vmatpush1.bf16.msra.mxu0 0
    %280 = vmatprep.subr.bf16.mxu0 0
    %281 = vmatpush1.bf16.msra.mxu0 0
    %282 = vmatprep.subr.bf16.mxu0 0
    %283 = vmatpush1.bf16.msra.mxu0 0
    %284 = vmatprep.mubr.bf16.mxu0 0
    %285 = vmatmul.mubr.bf16.gmra.mrb[0].mxu0 %v82
    %v286 = vpop.f32.mrb[0].mxu0
    %v287 = vadd.f32 0.0, %v286
    %v288 = vpop.f32.mrb[0].mxu0
    %v289 = vpop.f32.mrb[0].mxu0
    %v290 = vadd.f32 0.0, %v289
    %v291 = vpop.f32.mrb[0].mxu0
    %292 = vdwg.mxu0
    %v293 = vxor.u32 %v182, 2147483648
    %v294 = vxor.u32 %v185, 2147483648
    %v295 = vmul.f32 %v293, 1.442695
    %v296 = vpow.pop %v295
    %v297 = vmul.f32 %v294, 1.442695
    %v298 = vpow.pop %v297
    %v299 = vadd.f32 %v296, 1.0
    %v300 = vadd.f32 %v298, 1.0
    %v301 = vrcp.pop %v299
    %v302 = vmul.f32 1.0, %v301
    %v303 = vrcp.pop %v300
    %v304 = vmul.f32 1.0, %v303
    %v305 = vmul.f32 %v182, %v302
    %v306 = vmul.f32 %v185, %v304
    %v307 = vmul.f32 %v305, %v287
    %v308 = vmul.f32 %v306, %v290
    %v309 = vpack.c.bf16 %v308, %v307
    %v310 = vld [vmem:[#allocation2] sm:$0xff]
    %v311 = vld [vmem:[#allocation2 + $0x8] sm:$0xff]
    %v312 = vld [vmem:[#allocation9] sm:$0xf]
    %v313 = vld [vmem:[#allocation9 + $0x4] sm:$0xf]
    %v314 = vld [vmem:[#allocation9 + $0x8] sm:$0xf]
    %v315 = vld [vmem:[#allocation9 + $0xc] sm:$0xf]
    %v316 = vld [vmem:[#allocation9 + $0x10] sm:$0xf]
    %v317 = vld [vmem:[#allocation9 + $0x14] sm:$0xf]
    %v318 = vld [vmem:[#allocation9 + $0x18] sm:$0xf]
    %v319 = vld [vmem:[#allocation9 + $0x1c] sm:$0xf]
    %v320 = vld [vmem:[#allocation9 + $0x20] sm:$0xf]
    %v321 = vld [vmem:[#allocation9 + $0x24] sm:$0xf]
    %v322 = vld [vmem:[#allocation9 + $0x28] sm:$0xf]
    %v323 = vld [vmem:[#allocation9 + $0x2c] sm:$0xf]
    %v324 = vld [vmem:[#allocation9 + $0x30] sm:$0xf]
    %v325 = vld [vmem:[#allocation9 + $0x34] sm:$0xf]
    %v326 = vld [vmem:[#allocation9 + $0x38] sm:$0xf]
    %v327 = vld [vmem:[#allocation9 + $0x3c] sm:$0xf]
    %v344 = vunpack.c.l.b16 %v312
    %v345 = vunpack.c.l.b16 %v313
    %v346 = vunpack.c.l.b16 %v314
    %v347 = vunpack.c.l.b16 %v315
    %v348 = vunpack.c.l.b16 %v316
    %v349 = vunpack.c.l.b16 %v317
    %v350 = vunpack.c.l.b16 %v318
    %v351 = vunpack.c.l.b16 %v319
    %v352 = vunpack.c.l.b16 %v320
    %v353 = vunpack.c.l.b16 %v321
    %v354 = vunpack.c.l.b16 %v322
    %v355 = vunpack.c.l.b16 %v323
    %v356 = vunpack.c.l.b16 %v324
    %v357 = vunpack.c.l.b16 %v325
    %v358 = vunpack.c.l.b16 %v326
    %v359 = vunpack.c.l.b16 %v327
    %v360 = vpack.c.b16 %v345, %v344
    %v361 = vpack.c.b16 %v347, %v346
    %v362 = vpack.c.b16 %v349, %v348
    %v363 = vpack.c.b16 %v351, %v350
    %v364 = vpack.c.b16 %v353, %v352
    %v365 = vpack.c.b16 %v355, %v354
    %v366 = vpack.c.b16 %v357, %v356
    %v367 = vpack.c.b16 %v359, %v358
    %376 = vmatprep.subr.bf16.mxu0 0
    %377 = vmatpush1.bf16.msra.mxu0 %v360
    %378 = vmatprep.subr.bf16.mxu0 0
    %379 = vmatpush1.bf16.msra.mxu0 %v361
    %380 = vmatprep.subr.bf16.mxu0 0
    %381 = vmatpush1.bf16.msra.mxu0 %v362
    %382 = vmatprep.subr.bf16.mxu0 0
    %383 = vmatpush1.bf16.msra.mxu0 %v363
    %384 = vmatprep.subr.bf16.mxu0 0
    %385 = vmatpush1.bf16.msra.mxu0 %v364
    %386 = vmatprep.subr.bf16.mxu0 0
    %387 = vmatpush1.bf16.msra.mxu0 %v365
    %388 = vmatprep.subr.bf16.mxu0 0
    %389 = vmatpush1.bf16.msra.mxu0 %v366
    %390 = vmatprep.subr.bf16.mxu0 0
    %391 = vmatpush1.bf16.msra.mxu0 %v367
    %392 = vmatprep.subr.bf16.mxu0 0
    %393 = vmatpush1.bf16.msra.mxu0 0
    %394 = vmatprep.subr.bf16.mxu0 0
    %395 = vmatpush1.bf16.msra.mxu0 0
    %396 = vmatprep.subr.bf16.mxu0 0
    %397 = vmatpush1.bf16.msra.mxu0 0
    %398 = vmatprep.subr.bf16.mxu0 0
    %399 = vmatpush1.bf16.msra.mxu0 0
    %400 = vmatprep.subr.bf16.mxu0 0
    %401 = vmatpush1.bf16.msra.mxu0 0
    %402 = vmatprep.subr.bf16.mxu0 0
    %403 = vmatpush1.bf16.msra.mxu0 0
    %404 = vmatprep.subr.bf16.mxu0 0
    %405 = vmatpush1.bf16.msra.mxu0 0
    %406 = vmatprep.subr.bf16.mxu0 0
    %407 = vmatpush1.bf16.msra.mxu0 0
    %408 = vmatprep.mubr.bf16.mxu0 0
    %409 = vmatmul.mubr.bf16.gmra.mrb[0].mxu0 %v309
    %v410 = vpop.f32.mrb[0].mxu0
    %v411 = vadd.f32 0.0, %v410
    %v412 = vpop.f32.mrb[0].mxu0
    %v413 = vpop.f32.mrb[0].mxu0
    %v414 = vadd.f32 0.0, %v413
    %v415 = vpop.f32.mrb[0].mxu0
    %416 = vdwg.mxu0
    %v417 = vadd.f32 %v310, %v411
    %v418 = vadd.f32 %v311, %v414
    %419 = vst [vmem:[#allocation2] sm:$0xff] %v417
    %420 = vst [vmem:[#allocation2 + $0x8] sm:$0xff] %v418
    // Predicated region
    $region38: #{tpu_custom_call.1} parent=1 // pred_check
      %p421 = pneg %p74
    $region39: #{tpu_custom_call.1} parent=1 // pred_check_branch
      %423 = sbr.rel (%p421) target = $region41
    $region40: #{tpu_custom_call.1} parent=1 // pred_region
      %v424 = vld [vmem:[#allocation2] sm:$0xff]
      %v425 = vld [vmem:[#allocation2 + $0x8] sm:$0xff]
      %426 = vst [vmem:[#allocation11] sm:$0xff] %v424
      %427 = vst [vmem:[#allocation11 + $0x8] sm:$0xff] %v425
    $region41: #{tpu_custom_call.1} parent=1 // pred_fallthru
      _
    // Predicated region
    $region42: #{tpu_custom_call.1} parent=1 // pred_check
      _
    $region43: #{tpu_custom_call.1} parent=1 // pred_check_branch
      %429 = sbr.rel (0) target = $region45
    $region44: #{tpu_custom_call.1} parent=1 // pred_region
      %s431 = ssub.s32 256, 256
      %432 = vsyncadd [#allocation5], %s431
      %s433 = sshll.u32 [#allocation11], 4
      %s434 = int_to_ptr.vmem [resolvable:$true] %s433
      %439 = dma.vmem_to_hbm [thread:$0]  %s434, 256, %s4, [#allocation5], 128, 128, 8
    $region45: #{tpu_custom_call.1} parent=1 // pred_fallthru
      _
    // Predicated region
    $region46: #{tpu_custom_call.1} parent=1 // pred_check
      _
    $region47: #{tpu_custom_call.1} parent=1 // pred_check_branch
      %441 = sbr.rel (0) target = $region49
    $region48: #{tpu_custom_call.1} parent=1 // pred_region
      %442 = dma.done [#allocation5], 256
    $region49: #{tpu_custom_call.1} parent=1 // pred_fallthru
      _
    %443 = vsyncpa [#allocation4], 1
    %444 = vsyncpa [#allocation7], 1
    %445 = vsyncpa [#allocation10], 1
    %446 = vsyncpa [#allocation5], 1

</llo_original>
